<compile_context>
chip_gen: v7x
topology: tpu7x:2x2x1
jax: 0.10.0
libtpu: 0.0.40
codegen_flags: <defaults>
</compile_context>

<pallas_src>
import functools

import jax
import jax.numpy as jnp
from jax.experimental import pallas as pl
from jax.experimental.pallas import tpu as pltpu


# ----------------------------------------------------------------------------
# Pallas kernel: per-batch fused (h2h conv) + (l2h conv) + bilinear up + add
# ----------------------------------------------------------------------------
def last_octave_kernel(xh_ref, xl_ref, wh_ref, wl_ref, bt_ref, out_ref):
    # xh_ref : (Ch*KK, HW) bf16  fused im2col slab, high branch, one batch elem
    # xl_ref : (Cl*KK, hw) bf16  fused im2col slab, low  branch, one batch elem
    # wh_ref : (Cout, Ch*KK) bf16
    # wl_ref : (Cout, Cl*KK) bf16
    # bt_ref : (hw, HW) f32      transposed bilinear interpolation matrix
    # out_ref: (Cout, HW) f32    lane-dense (HW = 256) output slab
    acc_h = jnp.dot(wh_ref[...], xh_ref[...],
                    preferred_element_type=jnp.float32)          # (Cout, HW)
    acc_l = jnp.dot(wl_ref[...], xl_ref[...],
                    preferred_element_type=jnp.float32)          # (Cout, hw)
    # Bilinear upsample of the low branch to high resolution, lane-dense result.
    # TODO(synk): for non-toy resolutions replace this dense (hw, HW) matmul by
    # the separable A_h @ Y @ A_w^T form (and tile HW) to bound VMEM on v7x.
    up = jnp.dot(acc_l, bt_ref[...],
                 preferred_element_type=jnp.float32)             # (Cout, HW)
    out_ref[...] = (acc_h + up).astype(out_ref.dtype)


# ----------------------------------------------------------------------------
# Glue: channel-major fused im2col, per-module weights, interpolation matrix
# ----------------------------------------------------------------------------
def _im2col_cmaj(x_nchw, k=3, pad=1):
    """NCHW -> (N, C*k*k, H*W) fused im2col slab, rows ordered (c, kh, kw)."""
    n, c, hh, ww = x_nchw.shape
    xp = jnp.pad(x_nchw, ((0, 0), (0, 0), (pad, pad), (pad, pad)))
    taps = []
    for kh in range(k):
        for kw in range(k):
            taps.append(xp[:, :, kh:kh + hh, kw:kw + ww].reshape(n, c, hh * ww))
    # (N, C, KK, H*W) -> (N, C*KK, H*W); row index = c*KK + kh*k + kw, which
    # matches torch weight.reshape(Cout, Cin*k*k) ordering.
    # TODO(synk): for large resolutions, build this slab in VMEM inside the
    # kernel (padded-slab DMA + static slices) to avoid the k*k HBM blowup.
    return jnp.stack(taps, axis=2).reshape(n, c * k * k, hh * ww)


def _interp_matrix(out_size, in_size):
    """1-D bilinear interpolation matrix, PyTorch align_corners=False."""
    scale = in_size / out_size
    dst = jnp.arange(out_size, dtype=jnp.float32)
    src = jnp.maximum((dst + 0.5) * scale - 0.5, 0.0)
    i0 = jnp.minimum(jnp.floor(src).astype(jnp.int32), in_size - 1)
    i1 = jnp.minimum(i0 + 1, in_size - 1)
    lam = src - i0.astype(jnp.float32)
    a = jnp.zeros((out_size, in_size), jnp.float32)
    a = a.at[jnp.arange(out_size), i0].add(1.0 - lam)
    a = a.at[jnp.arange(out_size), i1].add(lam)
    return a


@functools.partial(jax.jit, static_argnames=())
def last_octave_conv(x_h_nchw, x_l_nchw, w_h2h_oihw, w_l2h_oihw):
    """Forward pass of LastOctaveConv (stride=1, padding=1, 3x3, no bias)."""
    n, ch, H, W = x_h_nchw.shape
    _, cl, h, w = x_l_nchw.shape
    cout = w_h2h_oihw.shape[0]
    kk = w_h2h_oihw.shape[2] * w_h2h_oihw.shape[3]

    # Channel-major fused im2col slabs (bf16 matmul operands, f32 accumulation).
    xh_col = _im2col_cmaj(x_h_nchw).astype(jnp.bfloat16)   # (N, Ch*KK, H*W)
    xl_col = _im2col_cmaj(x_l_nchw).astype(jnp.bfloat16)   # (N, Cl*KK, h*w)
    wh = w_h2h_oihw.reshape(cout, ch * kk).astype(jnp.bfloat16)   # (Cout, Ch*KK)
    wl = w_l2h_oihw.reshape(cout, cl * kk).astype(jnp.bfloat16)   # (Cout, Cl*KK)

    # Transposed separable-bilinear interpolation matrix: (h*w, H*W), f32.
    a_h = _interp_matrix(H, h)                               # (H, h)
    a_w = _interp_matrix(W, w)                               # (W, w)
    b_t = jnp.einsum('Hi,Wj->ijHW', a_h, a_w).reshape(h * w, H * W)

    out_cmaj = pl.pallas_call(
        last_octave_kernel,
        out_shape=jax.ShapeDtypeStruct((n, cout, H * W), jnp.float32),
        grid=(n,),
        in_specs=[
            pl.BlockSpec((None, ch * kk, H * W), lambda i: (i, 0, 0)),
            pl.BlockSpec((None, cl * kk, h * w), lambda i: (i, 0, 0)),
            pl.BlockSpec((cout, ch * kk), lambda i: (0, 0)),
            pl.BlockSpec((cout, cl * kk), lambda i: (0, 0)),
            pl.BlockSpec((h * w, H * W), lambda i: (0, 0)),
        ],
        out_specs=pl.BlockSpec((None, cout, H * W), lambda i: (i, 0, 0)),
        compiler_params=pltpu.CompilerParams(
            dimension_semantics=("parallel",)),
    )(xh_col, xl_col, wh, wl, b_t)

    # (N, Cout, H*W) is already channel-major: plain reshape to NCHW.
    return out_cmaj.reshape(n, cout, H, W)


# ----------------------------------------------------------------------------
# Pure-JAX reference (for verification of the Pallas kernel)
# ----------------------------------------------------------------------------
def reference_forward(x_h_nchw, x_l_nchw, w_h2h, w_l2h):
    yh = jax.lax.conv_general_dilated(
        x_h_nchw, w_h2h, (1, 1), ((1, 1), (1, 1)),
        dimension_numbers=('NCHW', 'OIHW', 'NCHW'))
    yl = jax.lax.conv_general_dilated(
        x_l_nchw, w_l2h, (1, 1), ((1, 1), (1, 1)),
        dimension_numbers=('NCHW', 'OIHW', 'NCHW'))
    H, W = yh.shape[2], yh.shape[3]
    a_h = _interp_matrix(H, yl.shape[2])
    a_w = _interp_matrix(W, yl.shape[3])
    up = jnp.einsum('Hi,ncij,Wj->ncHW', a_h, yl, a_w)
    return yh + up


# ----------------------------------------------------------------------------
# Main
# ----------------------------------------------------------------------------
if __name__ == "__main__":
    # Module config: out_channels=8, alpha=0.5, kernel_size=(3,3), padding=1,
    # stride=1 (default) -> h2h in_ch = 4, l2h in_ch = 4.
    out_channels = 8
    alpha = 0.5
    cl = int(alpha * out_channels)          # 4  (l2h input channels)
    ch = out_channels - cl                  # 4  (h2h input channels)
    N, H, W = 2, 16, 16
    h, w = H // 2, W // 2                   # low-frequency branch at half res

    key = jax.random.PRNGKey(0)
    k1, k2, k3, k4 = jax.random.split(key, 4)

    x_h = jax.random.normal(k1, (N, ch, H, W), dtype=jnp.float32)
    x_l = jax.random.normal(k2, (N, cl, h, w), dtype=jnp.float32)

    # Deterministic weight init (kaiming-like scale), OIHW like torch Conv2d.
    w_h2h = jax.random.normal(k3, (out_channels, ch, 3, 3), jnp.float32) / (ch * 9) ** 0.5
    w_l2h = jax.random.normal(k4, (out_channels, cl, 3, 3), jnp.float32) / (cl * 9) ** 0.5

    out = jax.block_until_ready(last_octave_conv(x_h, x_l, w_h2h, w_l2h))
    ref = jax.block_until_ready(reference_forward(x_h, x_l, w_h2h, w_l2h))

    assert out.shape == (N, out_channels, H, W), out.shape
    # bf16 matmul operands -> relaxed tolerance vs. the f32 reference.
    assert jnp.allclose(out, ref, atol=5e-2, rtol=5e-2), \
        float(jnp.max(jnp.abs(out - ref)))

    print("KERNEL_OK")
</pallas_src>

<mosaic_0001>
module attributes {stable_mosaic.version = 11 : i64} {
  func.func private @main(%arg0: i32) attributes {dimension_semantics = [#tpu.dimension_semantics<core_parallel>], iteration_bounds = array<i64: 2>, tpu.core_type = #tpu.core_type<sc_scalar_subcore>, window_params = []} {
    return
  }
}

module attributes {stable_mosaic.version = 11 : i64} {
  func.func private @main(%arg0: i32) attributes {dimension_semantics = [#tpu.dimension_semantics<core_parallel>], iteration_bounds = array<i64: 2>, tpu.core_type = #tpu.core_type<sc_scalar_subcore>, window_params = []} {
    return
  }
}

module attributes {stable_mosaic.version = 11 : i64} {
  func.func @last_octave_kernel(%arg0: i32, %arg1: memref<1x36x256xbf16, #tpu.memory_space<vmem>>, %arg2: memref<1x36x64xbf16, #tpu.memory_space<vmem>>, %arg3: memref<8x36xbf16, #tpu.memory_space<vmem>>, %arg4: memref<8x36xbf16, #tpu.memory_space<vmem>>, %arg5: memref<64x256xf32, #tpu.memory_space<vmem>>, %arg6: memref<1x8x256xf32, #tpu.memory_space<vmem>>) attributes {dimension_semantics = [#tpu.dimension_semantics<parallel>], iteration_bounds = array<i64: 2>, scalar_prefetch = 0 : i64, scratch_operands = 0 : i64, tpu.core_type = #tpu.core_type<tc>, window_params = [{transform_indices = @transform_0, window_bounds = array<i64: 1, 36, 256>}, {transform_indices = @transform_1, window_bounds = array<i64: 1, 36, 64>}, {pipeline_mode = #tpu.pipeline_mode<synchronous>, transform_indices = @transform_2, window_bounds = array<i64: 8, 36>}, {pipeline_mode = #tpu.pipeline_mode<synchronous>, transform_indices = @transform_3, window_bounds = array<i64: 8, 36>}, {pipeline_mode = #tpu.pipeline_mode<synchronous>, transform_indices = @transform_4, window_bounds = array<i64: 64, 256>}, {transform_indices = @transform_5, window_bounds = array<i64: 1, 8, 256>}]} {
    %c0 = arith.constant 0 : index
    %c0_0 = arith.constant 0 : index
    %0 = vector.load %arg3[%c0, %c0_0] : memref<8x36xbf16, #tpu.memory_space<vmem>>, vector<8x36xbf16>
    %c0_1 = arith.constant 0 : index
    %c0_2 = arith.constant 0 : index
    %c0_3 = arith.constant 0 : index
    %1 = vector.load %arg1[%c0_1, %c0_2, %c0_3] : memref<1x36x256xbf16, #tpu.memory_space<vmem>>, vector<1x36x256xbf16>
    %2 = vector.shape_cast %1 : vector<1x36x256xbf16> to vector<36x256xbf16>
    %cst = arith.constant dense<0.000000e+00> : vector<8x256xf32>
    %3 = tpu.matmul %0, %2, %cst {dimension_numbers = #tpu.dot_dimension_numbers<[1], [0], [0], [1], [0, 0, 1, 1], [], []>} : vector<8x36xbf16>, vector<36x256xbf16>, vector<8x256xf32> -> vector<8x256xf32>
    %c0_4 = arith.constant 0 : index
    %c0_5 = arith.constant 0 : index
    %4 = vector.load %arg4[%c0_4, %c0_5] : memref<8x36xbf16, #tpu.memory_space<vmem>>, vector<8x36xbf16>
    %c0_6 = arith.constant 0 : index
    %c0_7 = arith.constant 0 : index
    %c0_8 = arith.constant 0 : index
    %5 = vector.load %arg2[%c0_6, %c0_7, %c0_8] : memref<1x36x64xbf16, #tpu.memory_space<vmem>>, vector<1x36x64xbf16>
    %6 = vector.shape_cast %5 : vector<1x36x64xbf16> to vector<36x64xbf16>
    %cst_9 = arith.constant dense<0.000000e+00> : vector<8x64xf32>
    %7 = tpu.matmul %4, %6, %cst_9 {dimension_numbers = #tpu.dot_dimension_numbers<[1], [0], [0], [1], [0, 0, 1, 1], [], []>} : vector<8x36xbf16>, vector<36x64xbf16>, vector<8x64xf32> -> vector<8x64xf32>
    %c0_10 = arith.constant 0 : index
    %c0_11 = arith.constant 0 : index
    %8 = vector.load %arg5[%c0_10, %c0_11] : memref<64x256xf32, #tpu.memory_space<vmem>>, vector<64x256xf32>
    %cst_12 = arith.constant dense<0.000000e+00> : vector<8x256xf32>
    %9 = tpu.matmul %7, %8, %cst_12 {dimension_numbers = #tpu.dot_dimension_numbers<[1], [0], [0], [1], [0, 0, 1, 1], [], []>} : vector<8x64xf32>, vector<64x256xf32>, vector<8x256xf32> -> vector<8x256xf32>
    %10 = arith.addf %3, %9 : vector<8x256xf32>
    %c0_13 = arith.constant 0 : index
    %c0_14 = arith.constant 0 : index
    %c0_15 = arith.constant 0 : index
    %11 = vector.load %arg6[%c0_13, %c0_14, %c0_15] : memref<1x8x256xf32, #tpu.memory_space<vmem>>, vector<1x8x256xf32>
    %12 = vector.shape_cast %11 : vector<1x8x256xf32> to vector<8x256xf32>
    %13 = vector.shape_cast %10 : vector<8x256xf32> to vector<1x8x256xf32>
    tpu.vector_store %arg6[%c0_13, %c0_14, %c0_15], %13 {strides = array<i32>} : memref<1x8x256xf32, #tpu.memory_space<vmem>>, vector<1x8x256xf32>,
    return
  }
  func.func @transform_0(%arg0: i32) -> (i32, i32, i32) {
    %c0_i32 = arith.constant 0 : i32
    %c0_i32_0 = arith.constant 0 : i32
    %c0_i32_1 = arith.constant 0 : i32
    return %arg0, %c0_i32, %c0_i32_0 : i32, i32, i32
  }
  func.func @transform_1(%arg0: i32) -> (i32, i32, i32) {
    %c0_i32 = arith.constant 0 : i32
    %c0_i32_0 = arith.constant 0 : i32
    %c0_i32_1 = arith.constant 0 : i32
    return %arg0, %c0_i32, %c0_i32_0 : i32, i32, i32
  }
  func.func @transform_2(%arg0: i32) -> (i32, i32) {
    %c0_i32 = arith.constant 0 : i32
    %c0_i32_0 = arith.constant 0 : i32
    %c0_i32_1 = arith.constant 0 : i32
    return %c0_i32, %c0_i32_0 : i32, i32
  }
  func.func @transform_3(%arg0: i32) -> (i32, i32) {
    %c0_i32 = arith.constant 0 : i32
    %c0_i32_0 = arith.constant 0 : i32
    %c0_i32_1 = arith.constant 0 : i32
    return %c0_i32, %c0_i32_0 : i32, i32
  }
  func.func @transform_4(%arg0: i32) -> (i32, i32) {
    %c0_i32 = arith.constant 0 : i32
    %c0_i32_0 = arith.constant 0 : i32
    %c0_i32_1 = arith.constant 0 : i32
    return %c0_i32, %c0_i32_0 : i32, i32
  }
  func.func @transform_5(%arg0: i32) -> (i32, i32, i32) {
    %c0_i32 = arith.constant 0 : i32
    %c0_i32_0 = arith.constant 0 : i32
    %c0_i32_1 = arith.constant 0 : i32
    return %arg0, %c0_i32, %c0_i32_0 : i32, i32, i32
  }
}

</mosaic_0001>

<llo_original>
// kernel: last_octave_conv.1
$region0: #{last_octave_conv.1}
  #allocation0 [shape = 'u32[]', space=smem, size = 0x4, offset = 0x4, fixed_abs, tag = 'smem constant byte address 0x4 - core index']
  #allocation1 [shape = 'u32[144,128]{1,0:T(1,128)}', space=vmem, size = 0x12000, scoped, tag = 'internal scratch']
  %s0 = inlined_call_operand.vmem [shape: bf16[2,36,256], index: 0, kind: input, shape index: {}]
  %s1 = inlined_call_operand.vmem [shape: bf16[2,36,64], index: 1, kind: input, shape index: {}]
  %s2 = inlined_call_operand.vmem [shape: bf16[8,36], index: 2, kind: input, shape index: {}]
  %s3 = inlined_call_operand.vmem [shape: bf16[8,36], index: 3, kind: input, shape index: {}]
  %s4 = inlined_call_operand.vmem [shape: f32[64,256], index: 4, kind: input, shape index: {}]
  %s5 = inlined_call_operand.vmem [shape: f32[2,8,256], index: 5, kind: output, shape index: {}]
  %s6 = sld [smem:[#allocation0]]
  $region53: #{last_octave_conv.1} parent=0
    _
  %s8 = ssub.s32 1, %s6
  %s9 = scalar_select 0, %s8, %s6
  loop: start=0, step=1, limit=4
  $region2: #{last_octave_conv.1} parent=0 // loop_pre_header
    _
  $region3: #{last_octave_conv.1} parent=0 // loop_header
    %s11 = sphi 0, %s15
    %p12 = scmp.ge.s32.totalorder %s11, 4
    %s21 = sphi 0, %s23
    %s24 = sphi 0, %s21
    %s25 = sphi 0, %s24
    %s41 = sphi 0, %s25
    %s47 = sphi 0, %s49
    %s50 = sphi 0, %s47
    %s51 = sphi 0, %s50
    %s67 = sphi 0, %s51
    %s71 = sphi 0, %s71
    %s73 = sphi 0, %s71
    %s74 = sphi 0, %s73
    %s88 = sphi 0, %s74
    %s92 = sphi 0, %s92
    %s94 = sphi 0, %s92
    %s95 = sphi 0, %s94
    %s109 = sphi 0, %s95
    %s113 = sphi 0, %s113
    %s115 = sphi 0, %s113
    %s116 = sphi 0, %s115
    %s130 = sphi 0, %s116
    %s136 = sphi 0, %s138
    %s139 = sphi 0, %s136
    %s140 = sphi 0, %s139
    %s156 = sphi 0, %s140
  $region4: #{last_octave_conv.1} parent=0 // loop_header_branch
    %14 = sbr.rel (%p12) target = $region8
  $region5: #{last_octave_conv.1} parent=0 // loop_body
    %s16 = ssub.s32 %s11, 1
    %s17 = ssub.s32 %s11, 2
    %s18 = sadd.s32 %s11, 1
    %s19 = ssub.s32 %s11, %s18
    %p20 = scmp.eq.s32.totalorder %s19, 0
    %s22 = sadd.s32 %s21, 1
    %s23 = scalar_select %p20, %s21, %s22
    %p26 = pneg %p20
    %p27 = scmp.eq.s32.totalorder %s11, 1
    %p28 = por %p26, %p27
    %p29 = scmp.ne.s32.totalorder %s21, %s24
    %p30 = scmp.eq.s32.totalorder %s11, 0
    %p31 = por %p29, %p30
    %p32 = scmp.ne.s32.totalorder %s21, %s24
    %p33 = scmp.eq.s32.totalorder %s16, 1
    %p34 = por %p32, %p33
    %p35 = scmp.ne.s32.totalorder %s24, %s25
    %p36 = scmp.eq.s32.totalorder %s16, 0
    %p37 = por %p35, %p36
    %p38 = scmp.ne.s32.totalorder %s24, %s25
    %p39 = scmp.eq.s32.totalorder %s17, 1
    %p40 = por %p38, %p39
    %p42 = scmp.ne.s32.totalorder %s25, %s41
    %p43 = scmp.eq.s32.totalorder %s17, 0
    %p44 = por %p42, %p43
    %s45 = ssub.s32 %s11, %s18
    %p46 = scmp.eq.s32.totalorder %s45, 0
    %s48 = sadd.s32 %s47, 1
    %s49 = scalar_select %p46, %s47, %s48
    %p52 = pneg %p46
    %p53 = scmp.eq.s32.totalorder %s11, 1
    %p54 = por %p52, %p53
    %p55 = scmp.ne.s32.totalorder %s47, %s50
    %p56 = scmp.eq.s32.totalorder %s11, 0
    %p57 = por %p55, %p56
    %p58 = scmp.ne.s32.totalorder %s47, %s50
    %p59 = scmp.eq.s32.totalorder %s16, 1
    %p60 = por %p58, %p59
    %p61 = scmp.ne.s32.totalorder %s50, %s51
    %p62 = scmp.eq.s32.totalorder %s16, 0
    %p63 = por %p61, %p62
    %p64 = scmp.ne.s32.totalorder %s50, %s51
    %p65 = scmp.eq.s32.totalorder %s17, 1
    %p66 = por %p64, %p65
    %p68 = scmp.ne.s32.totalorder %s51, %s67
    %p69 = scmp.eq.s32.totalorder %s17, 0
    %p70 = por %p68, %p69
    %s72 = sadd.s32 %s71, 1
    %p75 = scmp.eq.s32.totalorder %s11, 1
    %p76 = scmp.ne.s32.totalorder %s71, %s73
    %p77 = scmp.eq.s32.totalorder %s11, 0
    %p78 = por %p76, %p77
    %p79 = scmp.ne.s32.totalorder %s71, %s73
    %p80 = scmp.eq.s32.totalorder %s16, 1
    %p81 = por %p79, %p80
    %p82 = scmp.ne.s32.totalorder %s73, %s74
    %p83 = scmp.eq.s32.totalorder %s16, 0
    %p84 = por %p82, %p83
    %p85 = scmp.ne.s32.totalorder %s73, %s74
    %p86 = scmp.eq.s32.totalorder %s17, 1
    %p87 = por %p85, %p86
    %p89 = scmp.ne.s32.totalorder %s74, %s88
    %p90 = scmp.eq.s32.totalorder %s17, 0
    %p91 = por %p89, %p90
    %s93 = sadd.s32 %s92, 1
    %p96 = scmp.eq.s32.totalorder %s11, 1
    %p97 = scmp.ne.s32.totalorder %s92, %s94
    %p98 = scmp.eq.s32.totalorder %s11, 0
    %p99 = por %p97, %p98
    %p100 = scmp.ne.s32.totalorder %s92, %s94
    %p101 = scmp.eq.s32.totalorder %s16, 1
    %p102 = por %p100, %p101
    %p103 = scmp.ne.s32.totalorder %s94, %s95
    %p104 = scmp.eq.s32.totalorder %s16, 0
    %p105 = por %p103, %p104
    %p106 = scmp.ne.s32.totalorder %s94, %s95
    %p107 = scmp.eq.s32.totalorder %s17, 1
    %p108 = por %p106, %p107
    %p110 = scmp.ne.s32.totalorder %s95, %s109
    %p111 = scmp.eq.s32.totalorder %s17, 0
    %p112 = por %p110, %p111
    %s114 = sadd.s32 %s113, 1
    %p117 = scmp.eq.s32.totalorder %s11, 1
    %p118 = scmp.ne.s32.totalorder %s113, %s115
    %p119 = scmp.eq.s32.totalorder %s11, 0
    %p120 = por %p118, %p119
    %p121 = scmp.ne.s32.totalorder %s113, %s115
    %p122 = scmp.eq.s32.totalorder %s16, 1
    %p123 = por %p121, %p122
    %p124 = scmp.ne.s32.totalorder %s115, %s116
    %p125 = scmp.eq.s32.totalorder %s16, 0
    %p126 = por %p124, %p125
    %p127 = scmp.ne.s32.totalorder %s115, %s116
    %p128 = scmp.eq.s32.totalorder %s17, 1
    %p129 = por %p127, %p128
    %p131 = scmp.ne.s32.totalorder %s116, %s130
    %p132 = scmp.eq.s32.totalorder %s17, 0
    %p133 = por %p131, %p132
    %s134 = ssub.s32 %s11, %s18
    %p135 = scmp.eq.s32.totalorder %s134, 0
    %s137 = sadd.s32 %s136, 1
    %s138 = scalar_select %p135, %s136, %s137
    %p141 = pneg %p135
    %p142 = scmp.eq.s32.totalorder %s11, 1
    %p143 = por %p141, %p142
    %p144 = scmp.ne.s32.totalorder %s136, %s139
    %p145 = scmp.eq.s32.totalorder %s11, 0
    %p146 = por %p144, %p145
    %p147 = scmp.ne.s32.totalorder %s136, %s139
    %p148 = scmp.eq.s32.totalorder %s16, 1
    %p149 = por %p147, %p148
    %p150 = scmp.ne.s32.totalorder %s139, %s140
    %p151 = scmp.eq.s32.totalorder %s16, 0
    %p152 = por %p150, %p151
    %p153 = scmp.ne.s32.totalorder %s139, %s140
    %p154 = scmp.eq.s32.totalorder %s17, 1
    %p155 = por %p153, %p154
    %p157 = scmp.ne.s32.totalorder %s140, %s156
    %p158 = scmp.eq.s32.totalorder %s17, 0
    %p159 = por %p157, %p158
    %p160 = scmp.le.s32.totalorder 1, %s11
    %p161 = scmp.lt.s32.totalorder %s11, 3
    %p162 = pnand %p160, %p161
    %p163 = pneg %p162
    // Predicated region
    $region9: #{last_octave_conv.1} parent=5 // pred_check
      _
    $region10: #{last_octave_conv.1} parent=5 // pred_check_branch
      %165 = sbr.rel (%p162) target = $region12
    $region11: #{last_octave_conv.1} parent=5 // pred_region
      %s166 = ssub.s32 %s11, 1
      // Predicated region
      $region13: #{last_octave_conv.1} parent=11 // pred_check
        %p167 = pneg %p84
      $region14: #{last_octave_conv.1} parent=11 // pred_check_branch
        %169 = sbr.rel (%p167) target = $region16
      $region15: #{last_octave_conv.1} parent=11 // pred_region
        _
      $region16: #{last_octave_conv.1} parent=11 // pred_fallthru
        _
      // Predicated region
      $region17: #{last_octave_conv.1} parent=11 // pred_check
        %p170 = pneg %p105
      $region18: #{last_octave_conv.1} parent=11 // pred_check_branch
        %172 = sbr.rel (%p170) target = $region20
      $region19: #{last_octave_conv.1} parent=11 // pred_region
        _
      $region20: #{last_octave_conv.1} parent=11 // pred_fallthru
        _
      // Predicated region
      $region21: #{last_octave_conv.1} parent=11 // pred_check
        %p173 = pneg %p126
      $region22: #{last_octave_conv.1} parent=11 // pred_check_branch
        %175 = sbr.rel (%p173) target = $region24
      $region23: #{last_octave_conv.1} parent=11 // pred_region
        _
      $region24: #{last_octave_conv.1} parent=11 // pred_fallthru
        _
    $region12: #{last_octave_conv.1} parent=5 // pred_fallthru
      _
    %p176 = scmp.lt.s32.totalorder %s11, 2
    // Predicated region
    $region25: #{last_octave_conv.1} parent=5 // pred_check
      %p177 = pneg %p176
    $region26: #{last_octave_conv.1} parent=5 // pred_check_branch
      %179 = sbr.rel (%p177) target = $region28
    $region27: #{last_octave_conv.1} parent=5 // pred_region
      // Predicated region
      $region29: #{last_octave_conv.1} parent=27 // pred_check
        %p180 = pneg %p31
      $region30: #{last_octave_conv.1} parent=27 // pred_check_branch
        %182 = sbr.rel (%p180) target = $region32
      $region31: #{last_octave_conv.1} parent=27 // pred_region
        %p183 = scmp.lt.s32.totalorder %s11, 1
        %s184 = scalar_select %p183, %s11, 1
        %s185 = smul.addr %s184, 10
        %s186 = smul.addr %s185, 4
        %s187 = scalar_lea.vmem %s0, %s186
      $region32: #{last_octave_conv.1} parent=27 // pred_fallthru
        _
      // Predicated region
      $region33: #{last_octave_conv.1} parent=27 // pred_check
        %p188 = pneg %p57
      $region34: #{last_octave_conv.1} parent=27 // pred_check_branch
        %190 = sbr.rel (%p188) target = $region36
      $region35: #{last_octave_conv.1} parent=27 // pred_region
        %p191 = scmp.lt.s32.totalorder %s11, 1
        %s192 = scalar_select %p191, %s11, 1
        %s193 = smul.addr %s192, 5
        %s194 = smul.addr %s193, 4
        %s195 = scalar_lea.vmem %s1, %s194
      $region36: #{last_octave_conv.1} parent=27 // pred_fallthru
        _
    $region28: #{last_octave_conv.1} parent=5 // pred_fallthru
      _
    %p196 = scmp.le.s32.totalorder 1, %s11
    %p197 = scmp.lt.s32.totalorder %s11, 3
    %p198 = pnand %p196, %p197
    %p199 = pneg %p198
    // Predicated region
    $region37: #{last_octave_conv.1} parent=5 // pred_check
      _
    $region38: #{last_octave_conv.1} parent=5 // pred_check_branch
      %201 = sbr.rel (%p198) target = $region40
    $region39: #{last_octave_conv.1} parent=5 // pred_region
      %s202 = ssub.s32 %s11, 1
      %p203 = scmp.lt.s32.totalorder %s16, 1
      %s204 = scalar_select %p203, %s16, 1
      %s205 = smul.addr %s204, 10
      %s206 = smul.addr %s205, 4
      %s207 = scalar_lea.vmem %s0, %s206
      %p208 = pneg %p37
      %p209 = pneg %p34
      %p210 = scmp.lt.s32.totalorder %s16, 1
      %s211 = scalar_select %p210, %s16, 1
      %s212 = smul.addr %s211, 5
      %s213 = smul.addr %s212, 4
      %s214 = scalar_lea.vmem %s1, %s213
      %p215 = pneg %p63
      %p216 = pneg %p60
      %p217 = pneg %p84
      %p218 = pneg %p81
      %p219 = pneg %p105
      %p220 = pneg %p102
      %p221 = pneg %p126
      %p222 = pneg %p123
      %p223 = pneg %p152
      %p224 = pneg %p149
      %p225 = scmp.lt.s32.totalorder %s16, 1
      %s226 = scalar_select %p225, %s16, 1
      %s227 = smul.addr %s226, 2
      %s228 = smul.addr %s227, 8
      %s229 = scalar_lea.vmem %s5, %s228
      %p230 = scmp.lt.s32.totalorder %s16, 1
      %s231 = scalar_select %p230, %s16, 1
      %s232 = smul.addr %s231, 10
      %s233 = smul.addr %s232, 4
      %s234 = scalar_lea.vmem %s0, %s233
      %p235 = scmp.lt.s32.totalorder %s16, 1
      %s236 = scalar_select %p235, %s16, 1
      %s237 = smul.addr %s236, 5
      %s238 = smul.addr %s237, 4
      %s239 = scalar_lea.vmem %s1, %s238
      %p240 = scmp.lt.s32.totalorder %s16, 1
      %s241 = scalar_select %p240, %s16, 1
      %s242 = smul.addr %s241, 2
      %s243 = smul.addr %s242, 8
      %s244 = scalar_lea.vmem %s5, %s243
      %v246 = vld [vmem:[%s2] sm:$0xf]
      %v247 = vld [vmem:[%s234] sm:$0xff]
      %v248 = vld [vmem:[%s234 + $0x8] sm:$0xff]
      %v249 = vld [vmem:[%s234 + $0x10] sm:$0xff]
      %v250 = vld [vmem:[%s234 + $0x18] sm:$0xff]
      %v251 = vld [vmem:[%s234 + $0x20] sm:$0x33]
      %v252 = vld [vmem:[%s3] sm:$0xf]
      %v253 = vld [vmem:[%s239] sm:$0xf]
      %v254 = vld [vmem:[%s239 + $0x4] sm:$0xf]
      %v255 = vld [vmem:[%s239 + $0x8] sm:$0xf]
      %v256 = vld [vmem:[%s239 + $0xc] sm:$0xf]
      %v257 = vld [vmem:[%s239 + $0x10] sm:$0x3]
      %v263 = vunpack.c.l.b16 %v253
      %v264 = vunpack.c.l.b16 %v254
      %v265 = vunpack.c.l.b16 %v255
      %v266 = vunpack.c.l.b16 %v256
      %v267 = vunpack.c.l.b16 %v257
      %v268 = vpack.c.b16 %v264, %v263
      %v269 = vpack.c.b16 %v266, %v265
      %v270 = vpack.c.b16 %v267, %v267
      %vm273 = vcmask 293888
      %v275 = vsel %vm273, %v252, 0
      %vm277 = vcmask 1041408
      %v279 = vsel %vm277, %v270, 0
      %281 = vmatprep.subr.bf16.mxu0 0
      %282 = vmatpush1.bf16.msra.mxu0 %v268
      %283 = vmatprep.subr.bf16.mxu0 0
      %284 = vmatpush1.bf16.msra.mxu0 %v269
      %285 = vmatprep.subr.bf16.mxu0 0
      %286 = vmatpush1.bf16.msra.mxu0 %v279
      %287 = vmatprep.subr.bf16.mxu0 0
      %288 = vmatpush1.bf16.msra.mxu0 0
      %289 = vmatprep.subr.bf16.mxu0 0
      %290 = vmatpush1.bf16.msra.mxu0 0
      %291 = vmatprep.subr.bf16.mxu0 0
      %292 = vmatpush1.bf16.msra.mxu0 0
      %293 = vmatprep.subr.bf16.mxu0 0
      %294 = vmatpush1.bf16.msra.mxu0 0
      %295 = vmatprep.subr.bf16.mxu0 0
      %296 = vmatpush1.bf16.msra.mxu0 0
      %297 = vmatprep.subr.bf16.mxu0 0
      %298 = vmatpush1.bf16.msra.mxu0 0
      %299 = vmatprep.subr.bf16.mxu0 0
      %300 = vmatpush1.bf16.msra.mxu0 0
      %301 = vmatprep.subr.bf16.mxu0 0
      %302 = vmatpush1.bf16.msra.mxu0 0
      %303 = vmatprep.subr.bf16.mxu0 0
      %304 = vmatpush1.bf16.msra.mxu0 0
      %305 = vmatprep.subr.bf16.mxu0 0
      %306 = vmatpush1.bf16.msra.mxu0 0
      %307 = vmatprep.subr.bf16.mxu0 0
      %308 = vmatpush1.bf16.msra.mxu0 0
      %309 = vmatprep.subr.bf16.mxu0 0
      %310 = vmatpush1.bf16.msra.mxu0 0
      %311 = vmatprep.subr.bf16.mxu0 0
      %312 = vmatpush1.bf16.msra.mxu0 0
      %313 = vmatprep.mubr.bf16.mxu0 0
      %314 = vmatmul.mubr.bf16.gmra.mrb[0].mxu0 %v275
      %v315 = vpop.f32.mrb[0].mxu0
      %v316 = vadd.f32 0.0, %v315
      %v317 = vpop.f32.mrb[0].mxu0
      %v318 = vpop.f32.mrb[0].mxu0
      %v319 = vpop.f32.mrb[0].mxu0
      %320 = vdwg.mxu0
      %v321 = vld [vmem:[%s4] sm:$0xff]
      %v322 = vld [vmem:[%s4 + $0x8] sm:$0xff]
      %v323 = vld [vmem:[%s4 + $0x10] sm:$0xff]
      %v324 = vld [vmem:[%s4 + $0x18] sm:$0xff]
      %v325 = vld [vmem:[%s4 + $0x20] sm:$0xff]
      %v326 = vld [vmem:[%s4 + $0x28] sm:$0xff]
      %v327 = vld [vmem:[%s4 + $0x30] sm:$0xff]
      %v328 = vld [vmem:[%s4 + $0x38] sm:$0xff]
      %v329 = vld [vmem:[%s4 + $0x40] sm:$0xff]
      %v330 = vld [vmem:[%s4 + $0x48] sm:$0xff]
      %v331 = vld [vmem:[%s4 + $0x50] sm:$0xff]
      %v332 = vld [vmem:[%s4 + $0x58] sm:$0xff]
      %v333 = vld [vmem:[%s4 + $0x60] sm:$0xff]
      %v334 = vld [vmem:[%s4 + $0x68] sm:$0xff]
      %v335 = vld [vmem:[%s4 + $0x70] sm:$0xff]
      %v336 = vld [vmem:[%s4 + $0x78] sm:$0xff]
      %vm337 = vcmask 523264
      %v339 = vsel %vm337, %v316, 0
      %341 = vmatprep.subr.mxu0 %v322
      %342 = vmatpush1.msra.mxu0 %v321
      %343 = vmatprep.subr.mxu0 %v324
      %344 = vmatpush1.msra.mxu0 %v323
      %345 = vmatprep.subr.mxu0 %v326
      %346 = vmatpush1.msra.mxu0 %v325
      %347 = vmatprep.subr.mxu0 %v328
      %348 = vmatpush1.msra.mxu0 %v327
      %349 = vmatprep.subr.mxu0 %v330
      %350 = vmatpush1.msra.mxu0 %v329
      %351 = vmatprep.subr.mxu0 %v332
      %352 = vmatpush1.msra.mxu0 %v331
      %353 = vmatprep.subr.mxu0 %v334
      %354 = vmatpush1.msra.mxu0 %v333
      %355 = vmatprep.subr.mxu0 %v336
      %356 = vmatpush1.msra.mxu0 %v335
      %357 = vmatprep.subr.mxu0 0.0
      %358 = vmatpush1.msra.mxu0 0.0
      %359 = vmatprep.subr.mxu0 0.0
      %360 = vmatpush1.msra.mxu0 0.0
      %361 = vmatprep.subr.mxu0 0.0
      %362 = vmatpush1.msra.mxu0 0.0
      %363 = vmatprep.subr.mxu0 0.0
      %364 = vmatpush1.msra.mxu0 0.0
      %365 = vmatprep.subr.mxu0 0.0
      %366 = vmatpush1.msra.mxu0 0.0
      %367 = vmatprep.subr.mxu0 0.0
      %368 = vmatpush1.msra.mxu0 0.0
      %369 = vmatprep.subr.mxu0 0.0
      %370 = vmatpush1.msra.mxu0 0.0
      %371 = vmatprep.subr.mxu0 0.0
      %372 = vmatpush1.msra.mxu0 0.0
      %373 = vmatprep.subr.mxu0 0.0
      %374 = vmatpush1.msra.mxu0 0.0
      %375 = vmatprep.subr.mxu0 0.0
      %376 = vmatpush1.msra.mxu0 0.0
      %377 = vmatprep.subr.mxu0 0.0
      %378 = vmatpush1.msra.mxu0 0.0
      %379 = vmatprep.subr.mxu0 0.0
      %380 = vmatpush1.msra.mxu0 0.0
      %381 = vmatprep.subr.mxu0 0.0
      %382 = vmatpush1.msra.mxu0 0.0
      %383 = vmatprep.subr.mxu0 0.0
      %384 = vmatpush1.msra.mxu0 0.0
      %385 = vmatprep.subr.mxu0 0.0
      %386 = vmatpush1.msra.mxu0 0.0
      %387 = vmatprep.subr.mxu0 0.0
      %388 = vmatpush1.msra.mxu0 0.0
      %389 = vmatprep.subr.mxu0 0.0
      %390 = vmatpush1.msra.mxu0 0.0
      %391 = vmatprep.subr.mxu0 0.0
      %392 = vmatpush1.msra.mxu0 0.0
      %393 = vmatprep.subr.mxu0 0.0
      %394 = vmatpush1.msra.mxu0 0.0
      %395 = vmatprep.subr.mxu0 0.0
      %396 = vmatpush1.msra.mxu0 0.0
      %397 = vmatprep.subr.mxu0 0.0
      %398 = vmatpush1.msra.mxu0 0.0
      %399 = vmatprep.subr.mxu0 0.0
      %400 = vmatpush1.msra.mxu0 0.0
      %401 = vmatprep.subr.mxu0 0.0
      %402 = vmatpush1.msra.mxu0 0.0
      %403 = vmatprep.subr.mxu0 0.0
      %404 = vmatpush1.msra.mxu0 0.0
      %405 = vmatprep.mubr.f32.mxu0 0.0
      %406 = vmatmul.mubr.f32.gmra.mrb[0].mxu0 %v339
      %v407 = vpop.f32.mrb[0].mxu0
      %v408 = vadd.f32 0.0, %v407
      %v409 = vpop.f32.mrb[0].mxu0
      %v410 = vadd.f32 0.0, %v409
      %411 = vdwg.mxu0
      %v417 = vunpack.c.l.b16 %v247
      %v418 = vunpack.c.h.b16 %v247
      %v419 = vunpack.c.l.b16 %v248
      %v420 = vunpack.c.h.b16 %v248
      %v421 = vunpack.c.l.b16 %v249
      %v422 = vunpack.c.h.b16 %v249
      %v423 = vunpack.c.l.b16 %v250
      %v424 = vunpack.c.h.b16 %v250
      %v425 = vunpack.c.l.b16 %v251
      %v426 = vunpack.c.h.b16 %v251
      %v427 = vpack.c.b16 %v419, %v417
      %v428 = vpack.c.b16 %v420, %v418
      %v429 = vpack.c.b16 %v423, %v421
      %v430 = vpack.c.b16 %v424, %v422
      %v431 = vpack.c.b16 %v425, %v425
      %v432 = vpack.c.b16 %v426, %v426
      %v438 = vsel %vm273, %v246, 0
      %v441 = vsel %vm277, %v431, 0
      %v444 = vsel %vm277, %v432, 0
      %446 = vmatprep.subr.bf16.mxu0 %v428
      %447 = vmatpush1.bf16.msra.mxu0 %v427
      %448 = vmatprep.subr.bf16.mxu0 %v430
      %449 = vmatpush1.bf16.msra.mxu0 %v429
      %450 = vmatprep.subr.bf16.mxu0 %v444
      %451 = vmatpush1.bf16.msra.mxu0 %v441
      %452 = vmatprep.subr.bf16.mxu0 0
      %453 = vmatpush1.bf16.msra.mxu0 0
      %454 = vmatprep.subr.bf16.mxu0 0
      %455 = vmatpush1.bf16.msra.mxu0 0
      %456 = vmatprep.subr.bf16.mxu0 0
      %457 = vmatpush1.bf16.msra.mxu0 0
      %458 = vmatprep.subr.bf16.mxu0 0
      %459 = vmatpush1.bf16.msra.mxu0 0
      %460 = vmatprep.subr.bf16.mxu0 0
      %461 = vmatpush1.bf16.msra.mxu0 0
      %462 = vmatprep.subr.bf16.mxu0 0
      %463 = vmatpush1.bf16.msra.mxu0 0
      %464 = vmatprep.subr.bf16.mxu0 0
      %465 = vmatpush1.bf16.msra.mxu0 0
      %466 = vmatprep.subr.bf16.mxu0 0
      %467 = vmatpush1.bf16.msra.mxu0 0
      %468 = vmatprep.subr.bf16.mxu0 0
      %469 = vmatpush1.bf16.msra.mxu0 0
      %470 = vmatprep.subr.bf16.mxu0 0
      %471 = vmatpush1.bf16.msra.mxu0 0
      %472 = vmatprep.subr.bf16.mxu0 0
      %473 = vmatpush1.bf16.msra.mxu0 0
      %474 = vmatprep.subr.bf16.mxu0 0
      %475 = vmatpush1.bf16.msra.mxu0 0
      %476 = vmatprep.subr.bf16.mxu0 0
      %477 = vmatpush1.bf16.msra.mxu0 0
      %478 = vmatprep.mubr.bf16.mxu0 0
      %479 = vmatmul.mubr.bf16.gmra.mrb[0].mxu0 %v438
      %v480 = vpop.f32.mrb[0].mxu0
      %v481 = vadd.f32 %v408, %v480
      %v482 = vpop.f32.mrb[0].mxu0
      %v483 = vadd.f32 %v410, %v482
      %v484 = vpop.f32.mrb[0].mxu0
      %v485 = vpop.f32.mrb[0].mxu0
      %486 = vdwg.mxu0
      %487 = vst [vmem:[%s244] sm:$0xff] %v481
      %488 = vst [vmem:[%s244 + $0x8] sm:$0xff] %v483
      %p489 = scmp.lt.s32.totalorder %s16, 1
      %s490 = scalar_select %p489, %s16, 1
      %s491 = smul.addr %s490, 2
      %s492 = smul.addr %s491, 8
      %s493 = scalar_lea.vmem %s5, %s492
      // Predicated region
      $region41: #{last_octave_conv.1} parent=39 // pred_check
        %p494 = pneg %p149
      $region42: #{last_octave_conv.1} parent=39 // pred_check_branch
        %496 = sbr.rel (%p494) target = $region44
      $region43: #{last_octave_conv.1} parent=39 // pred_region
        _
      $region44: #{last_octave_conv.1} parent=39 // pred_fallthru
        _
    $region40: #{last_octave_conv.1} parent=5 // pred_fallthru
      _
    %p497 = scmp.le.s32.totalorder 2, %s11
    // Predicated region
    $region45: #{last_octave_conv.1} parent=5 // pred_check
      %p498 = pneg %p497
    $region46: #{last_octave_conv.1} parent=5 // pred_check_branch
      %500 = sbr.rel (%p498) target = $region48
    $region47: #{last_octave_conv.1} parent=5 // pred_region
      %s501 = ssub.s32 %s11, 2
      // Predicated region
      $region49: #{last_octave_conv.1} parent=47 // pred_check
        %p502 = pneg %p155
      $region50: #{last_octave_conv.1} parent=47 // pred_check_branch
        %504 = sbr.rel (%p502) target = $region52
      $region51: #{last_octave_conv.1} parent=47 // pred_region
        %p505 = scmp.lt.s32.totalorder %s17, 1
        %s506 = scalar_select %p505, %s17, 1
        %s507 = smul.addr %s506, 2
        %s508 = smul.addr %s507, 8
        %s509 = scalar_lea.vmem %s5, %s508
      $region52: #{last_octave_conv.1} parent=47 // pred_fallthru
        _
    $region48: #{last_octave_conv.1} parent=5 // pred_fallthru
      _
  $region6: #{last_octave_conv.1} parent=0 // loop_footer
    %s15 = sadd.s32 1, %s11
  $region7: #{last_octave_conv.1} parent=0 // loop_footer_branch
    %10 = sbr.rel target = $region3
  $region8: #{last_octave_conv.1} parent=0 // loop_exit
    _

</llo_original>
